<compile_context>
chip_gen: v6e
topology: v6e:2x2x1
jax: 0.10.0
libtpu: 0.0.40
codegen_flags: <defaults>
</compile_context>

<pallas_src>
import functools

import jax
import jax.numpy as jnp
from jax.experimental import pallas as pl
from jax.experimental.pallas import tpu as pltpu


# ----------------------------------------------------------------------------
# Pallas kernel: fused (dual 1x1 conv + bias) -> bilinear x8 upsample -> add
# ----------------------------------------------------------------------------
def _head_kernel(bias_ref, feat_ref, m_ref, wy_ref, out_ref):
    # bias_ref : (1,)            f32, SMEM   (b_ba + b_fa)
    # feat_ref : (1, h, w*2C)    bf16        concat([ba, fa], ch) flattened
    # m_ref    : (w*2C, Wp)      bf16        conv weights folded into WxT
    # wy_ref   : (hb, h)         f32         row-interpolation block
    # out_ref  : (1, hb, Wp)     f32
    bias = bias_ref[0]                                      # scalar read first
    tmp = jnp.dot(feat_ref[0], m_ref[...],
                  preferred_element_type=jnp.float32)       # (h, Wp), K = w*2C
    up = jnp.dot(wy_ref[...], tmp,
                 preferred_element_type=jnp.float32)        # (hb, Wp), K = h
    out_ref[0] = up + bias


def _interp_matrix(n_in: int, n_out: int) -> jnp.ndarray:
    """Row-interpolation matrix for 1-D bilinear resize, align_corners=True."""
    if n_in == 1:
        return jnp.ones((n_out, 1), jnp.float32)
    src = jnp.arange(n_out, dtype=jnp.float32) * (n_in - 1) / (n_out - 1)
    i0 = jnp.clip(jnp.floor(src).astype(jnp.int32), 0, n_in - 2)
    i1 = i0 + 1
    w1 = src - i0.astype(jnp.float32)
    w0 = 1.0 - w1
    m = jnp.zeros((n_out, n_in), jnp.float32)
    m = m.at[jnp.arange(n_out), i0].add(w0)
    m = m.at[jnp.arange(n_out), i1].add(w1)
    return m


@functools.partial(jax.jit, static_argnames=("scale",))
def chocolate_head(ba_nhwc, fa_nhwc, w_ba, b_ba, w_fa, b_fa, *, scale=8):
    """ba_nhwc, fa_nhwc: (B, h, w, 32) float32.  Returns (B, h*scale, w*scale)."""
    B, h, w, c = ba_nhwc.shape
    assert c == 32
    c2 = 2 * c
    h_out, w_out = h * scale, w * scale
    w_out_pad = ((w_out + 127) // 128) * 128          # lane-dense output width

    # Exact f32 interpolation matrices; fold both 1x1-conv weight vectors into
    # the (padded) column matrix -> M with K = w*2C, N = Wout_pad.
    wy = _interp_matrix(h, h_out)                                   # (Hout, h)
    wxT = _interp_matrix(w, w_out).T                                # (w, Wout)
    wxT = jnp.pad(wxT, ((0, 0), (0, w_out_pad - w_out)))            # (w, Wp)
    w_cat = jnp.concatenate([w_ba, w_fa]).astype(jnp.float32)       # (2C,)
    m = (wxT[:, None, :] * w_cat[None, :, None]).reshape(w * c2, w_out_pad)
    m = m.astype(jnp.bfloat16)

    # Bias commutes with the (row-sum-1) upsample, so add it once at the end.
    bias = (b_ba + b_fa).reshape(1).astype(jnp.float32)

    # Concatenate branches on the channel axis; flatten (w, 2C) -> w*2C
    # (pure view in NHWC, no transpose).
    feat = jnp.concatenate([ba_nhwc, fa_nhwc], axis=-1)
    feat = feat.reshape(B, h, w * c2).astype(jnp.bfloat16)

    # Split Hout across 2 blocks only when B == 1 (keeps both cores busy
    # without re-running the K = w*2C matmul when B already parallelizes).
    n_hb = 2 if (B == 1 and h_out % 16 == 0) else 1
    hb = h_out // n_hb

    cost = pl.CostEstimate(
        flops=int(2 * B * n_hb * h * (w * c2) * w_out_pad
                  + 2 * B * h_out * h * w_out_pad),
        transcendentals=0,
        bytes_accessed=int(feat.size * 2 + m.size * 2 + wy.size * 4
                           + B * h_out * w_out_pad * 4),
    )

    out = pl.pallas_call(
        _head_kernel,
        out_shape=jax.ShapeDtypeStruct((B, h_out, w_out_pad), jnp.float32),
        grid=(B, n_hb),
        in_specs=[
            pl.BlockSpec(memory_space=pltpu.MemorySpace.SMEM),        # bias
            pl.BlockSpec((1, h, w * c2), lambda b, j: (b, 0, 0)),     # feat
            pl.BlockSpec((w * c2, w_out_pad), lambda b, j: (0, 0)),   # M
            pl.BlockSpec((hb, h), lambda b, j: (j, 0)),               # Wy
        ],
        out_specs=pl.BlockSpec((1, hb, w_out_pad), lambda b, j: (b, j, 0)),
        compiler_params=pltpu.CompilerParams(
            dimension_semantics=("parallel", "parallel")),
        cost_estimate=cost,
    )(bias, feat, m, wy)

    return out[:, :, :w_out]                         # strip lane padding


# ----------------------------------------------------------------------------
# ChocolateNet forward (NCHW public interface, like the PyTorch module)
# ----------------------------------------------------------------------------
def _standin_features(x_nchw, proj):
    # TODO(synk): PvtV2B2, BoundaryAttention, StructureAttention and
    # FeatureAggregation are not defined in the provided model.py; replaced by
    # a deterministic avg-pool(8) + fixed 3->32 channel projection producing
    # the documented (B, 32, H/8, W/8) features (returned here as NHWC).
    B, C, H, W = x_nchw.shape
    pooled = x_nchw.reshape(B, C, H // 8, 8, W // 8, 8).mean(axis=(3, 5))
    return jnp.einsum("bchw,cd->bhwd", pooled, proj)          # (B, h, w, 32)


def chocolate_net_forward(x_nchw, params):
    ba_res = _standin_features(x_nchw, params["proj_ba"])     # (B, h, w, 32)
    fa_res = _standin_features(x_nchw, params["proj_fa"])     # (B, h, w, 32)
    pred = chocolate_head(ba_res, fa_res,
                          params["w_ba"], params["b_ba"],
                          params["w_fa"], params["b_fa"], scale=8)
    return pred[:, None, :, :]                                # NCHW (B,1,H,W)


def _reference_head(ba, fa, w_ba, b_ba, w_fa, b_fa, *, scale=8):
    """Pure-JAX f32 reference of the PyTorch head (for a sanity check)."""
    B, h, w, c = ba.shape
    wy = _interp_matrix(h, h * scale)                 # (Hout, h)
    wx = _interp_matrix(w, w * scale)                 # (Wout, w)
    s = jnp.einsum("bhwc,c->bhw", ba, w_ba) + b_ba
    t = jnp.einsum("bhwc,c->bhw", fa, w_fa) + b_fa
    up = lambda z: jnp.einsum("Oh,bhw,Pw->bOP", wy, z, wx)
    return up(s) + up(t)


def init_params(key):
    k = jax.random.split(key, 6)
    return {
        # MyConv(32, 1, 1, use_bias=True): Conv2d weight (1,32,1,1) -> (32,)
        "w_ba": 0.1 * jax.random.normal(k[0], (32,), jnp.float32),
        "b_ba": 0.1 * jax.random.normal(k[1], (), jnp.float32),
        "w_fa": 0.1 * jax.random.normal(k[2], (32,), jnp.float32),
        "b_fa": 0.1 * jax.random.normal(k[3], (), jnp.float32),
        # deterministic stand-in projections for the missing sub-modules
        "proj_ba": 0.1 * jax.random.normal(k[4], (3, 32), jnp.float32),
        "proj_fa": 0.1 * jax.random.normal(k[5], (3, 32), jnp.float32),
    }


if __name__ == "__main__":
    key = jax.random.PRNGKey(0)
    pkey, xkey = jax.random.split(key)
    params = init_params(pkey)

    # Input image, NCHW like the PyTorch module: (batch=2, ch=3, 64, 64)
    x = jax.random.normal(xkey, (2, 3, 64, 64), jnp.float32)

    pred = chocolate_net_forward(x, params)
    jax.block_until_ready(pred)
    assert pred.shape == (2, 1, 64, 64), pred.shape

    # Numerical sanity check of the fused bf16-matmul head vs f32 reference.
    ba = _standin_features(x, params["proj_ba"])
    fa = _standin_features(x, params["proj_fa"])
    ref = _reference_head(ba, fa, params["w_ba"], params["b_ba"],
                          params["w_fa"], params["b_fa"], scale=8)
    err = float(jnp.max(jnp.abs(pred[:, 0] - ref)))
    assert err < 2e-2, f"head mismatch: max abs err {err}"

    # Also exercise the B == 1 path (Hout split across two parallel blocks).
    pred1 = chocolate_net_forward(x[:1], params)
    jax.block_until_ready(pred1)
    assert pred1.shape == (1, 1, 64, 64), pred1.shape

    print("KERNEL_OK")
</pallas_src>

<mosaic_0001>
module attributes {stable_mosaic.version = 11 : i64} {
  func.func private @main(%arg0: i32) attributes {dimension_semantics = [#tpu.dimension_semantics<core_parallel>], iteration_bounds = array<i64: 2>, tpu.core_type = #tpu.core_type<sc_scalar_subcore>, window_params = []} {
    return
  }
}

module attributes {stable_mosaic.version = 11 : i64} {
  func.func private @main(%arg0: i32) attributes {dimension_semantics = [#tpu.dimension_semantics<core_parallel>], iteration_bounds = array<i64: 2>, tpu.core_type = #tpu.core_type<sc_scalar_subcore>, window_params = []} {
    return
  }
}

module attributes {stable_mosaic.version = 11 : i64} {
  func.func @_head_kernel(%arg0: i32, %arg1: i32, %arg2: memref<1xf32, #tpu.memory_space<smem>>, %arg3: memref<1x8x512xbf16, #tpu.memory_space<vmem>>, %arg4: memref<512x128xbf16, #tpu.memory_space<vmem>>, %arg5: memref<64x8xf32, #tpu.memory_space<vmem>>, %arg6: memref<1x64x128xf32, #tpu.memory_space<vmem>>) attributes {dimension_semantics = [#tpu.dimension_semantics<parallel>, #tpu.dimension_semantics<parallel>], iteration_bounds = array<i64: 2, 1>, scalar_prefetch = 0 : i64, scratch_operands = 0 : i64, tpu.core_type = #tpu.core_type<tc>, window_params = [{transform_indices = @transform_0, window_bounds = array<i64: 1>}, {transform_indices = @transform_1, window_bounds = array<i64: 1, 8, 512>}, {pipeline_mode = #tpu.pipeline_mode<synchronous>, transform_indices = @transform_2, window_bounds = array<i64: 512, 128>}, {transform_indices = @transform_3, window_bounds = array<i64: 64, 8>}, {transform_indices = @transform_4, window_bounds = array<i64: 1, 64, 128>}]} {
    %c0 = arith.constant 0 : index
    %0 = memref.load %arg2[%c0] : memref<1xf32, #tpu.memory_space<smem>>
    %c0_0 = arith.constant 0 : index
    %c0_1 = arith.constant 0 : index
    %c0_2 = arith.constant 0 : index
    %1 = vector.load %arg3[%c0_0, %c0_1, %c0_2] : memref<1x8x512xbf16, #tpu.memory_space<vmem>>, vector<1x8x512xbf16>
    %2 = vector.shape_cast %1 : vector<1x8x512xbf16> to vector<8x512xbf16>
    %c0_3 = arith.constant 0 : index
    %c0_4 = arith.constant 0 : index
    %3 = vector.load %arg4[%c0_3, %c0_4] : memref<512x128xbf16, #tpu.memory_space<vmem>>, vector<512x128xbf16>
    %cst = arith.constant dense<0.000000e+00> : vector<8x128xf32>
    %4 = tpu.matmul %2, %3, %cst {dimension_numbers = #tpu.dot_dimension_numbers<[1], [0], [0], [1], [0, 0, 1, 1], [], []>} : vector<8x512xbf16>, vector<512x128xbf16>, vector<8x128xf32> -> vector<8x128xf32>
    %c0_5 = arith.constant 0 : index
    %c0_6 = arith.constant 0 : index
    %5 = vector.load %arg5[%c0_5, %c0_6] : memref<64x8xf32, #tpu.memory_space<vmem>>, vector<64x8xf32>
    %cst_7 = arith.constant dense<0.000000e+00> : vector<64x128xf32>
    %6 = tpu.matmul %5, %4, %cst_7 {dimension_numbers = #tpu.dot_dimension_numbers<[1], [0], [0], [1], [0, 0, 1, 1], [], []>} : vector<64x8xf32>, vector<8x128xf32>, vector<64x128xf32> -> vector<64x128xf32>
    %7 = vector.broadcast %0 : f32 to vector<64x128xf32>
    %8 = arith.addf %6, %7 : vector<64x128xf32>
    %c0_8 = arith.constant 0 : index
    %c0_9 = arith.constant 0 : index
    %c0_10 = arith.constant 0 : index
    %9 = vector.load %arg6[%c0_8, %c0_9, %c0_10] : memref<1x64x128xf32, #tpu.memory_space<vmem>>, vector<1x64x128xf32>
    %10 = vector.shape_cast %9 : vector<1x64x128xf32> to vector<64x128xf32>
    %11 = vector.shape_cast %8 : vector<64x128xf32> to vector<1x64x128xf32>
    tpu.vector_store %arg6[%c0_8, %c0_9, %c0_10], %11 {strides = array<i32>} : memref<1x64x128xf32, #tpu.memory_space<vmem>>, vector<1x64x128xf32>,
    return
  }
  func.func @transform_0(%arg0: i32, %arg1: i32) -> i32 {
    %c0_i32 = arith.constant 0 : i32
    %c0_i32_0 = arith.constant 0 : i32
    return %c0_i32 : i32
  }
  func.func @transform_1(%arg0: i32, %arg1: i32) -> (i32, i32, i32) {
    %c0_i32 = arith.constant 0 : i32
    %c0_i32_0 = arith.constant 0 : i32
    %c0_i32_1 = arith.constant 0 : i32
    return %arg0, %c0_i32, %c0_i32_0 : i32, i32, i32
  }
  func.func @transform_2(%arg0: i32, %arg1: i32) -> (i32, i32) {
    %c0_i32 = arith.constant 0 : i32
    %c0_i32_0 = arith.constant 0 : i32
    %c0_i32_1 = arith.constant 0 : i32
    return %c0_i32, %c0_i32_0 : i32, i32
  }
  func.func @transform_3(%arg0: i32, %arg1: i32) -> (i32, i32) {
    %c0_i32 = arith.constant 0 : i32
    %c0_i32_0 = arith.constant 0 : i32
    return %arg1, %c0_i32 : i32, i32
  }
  func.func @transform_4(%arg0: i32, %arg1: i32) -> (i32, i32, i32) {
    %c0_i32 = arith.constant 0 : i32
    %c0_i32_0 = arith.constant 0 : i32
    return %arg0, %arg1, %c0_i32 : i32, i32, i32
  }
}

</mosaic_0001>

<llo_original>
// kernel: chocolate_head.1
$region0: #{chocolate_head.1}
  #allocation0 [shape = 'u32[]', space=smem, size = 0x4, offset = 0x4, fixed_abs, tag = 'smem constant byte address 0x4 - core index']
  #allocation1 [shape = 'u32[144,128]{1,0:T(1,128)}', space=vmem, size = 0x12000, scoped, tag = 'internal scratch']
  #allocation2 [shape = 'f32[1]{0:T(128)S(6)}', space=smem, size = 0x200, scoped, tag = 'scoped memory for chocolate_head.1']
  %s0 = inlined_call_operand.<no memory space> [shape: f32[1], index: 0, kind: input, shape index: {}]
  %s1 = inlined_call_operand.vmem [shape: bf16[2,8,512], index: 1, kind: input, shape index: {}]
  %s2 = inlined_call_operand.vmem [shape: bf16[512,128], index: 2, kind: input, shape index: {}]
  %s3 = inlined_call_operand.vmem [shape: f32[64,8], index: 3, kind: input, shape index: {}]
  %s4 = inlined_call_operand.hbm [shape: f32[2,64,128], index: 4, kind: output, shape index: {}]
  %s5 = sld [smem:[#allocation0]]
  $region49: #{chocolate_head.1} parent=0
    _
  %s7 = ssub.s32 1, %s5
  %s8 = scalar_select 0, %s7, %s5
  %9 = sst [smem:[#allocation2]] %s0
  $region1: #{chocolate_head.1} parent=0
    #allocation3 [shape = 'u8[65536]{0}', space=vmem, size = 0x10000, scoped, tag = 'output window, operand 0']
    #allocation4 [shape = 's32[2]{0}', space=sflag, size = 0x8, scoped, tag = 'scoped memory for chocolate_head.1']
    %10 = vsyncpa [#allocation4], 0
    %s11 = scalar_lea.sflag [#allocation4], 1
    %12 = vsyncpa %s11, 0
    loop: start=0, step=1, limit=4
    $region2: #{chocolate_head.1} parent=1 // loop_pre_header
      _
    $region3: #{chocolate_head.1} parent=1 // loop_header
      %s14 = sphi 0, %s18
      %p15 = scmp.ge.s32.totalorder %s14, 4
      %s21 = sphi 0, %s33
      %s22 = sphi 0, %s29
      %s23 = sphi 0, %s21
      %s24 = sphi 0, %s22
      %s25 = sphi 0, %s23
      %s26 = sphi 0, %s24
      %s34 = sphi 0, %s34
      %s36 = sphi 0, %s34
      %s37 = sphi 0, %s36
      %s51 = sphi 0, %s37
      %s57 = sphi 0, %s59
      %s60 = sphi 0, %s57
      %s61 = sphi 0, %s60
      %s77 = sphi 0, %s61
      %s81 = sphi 0, %s81
      %s83 = sphi 0, %s81
      %s84 = sphi 0, %s83
      %s98 = sphi 0, %s84
      %s104 = sphi 0, %s106
      %s107 = sphi 0, %s104
      %s108 = sphi 0, %s107
      %s124 = sphi 0, %s108
      %s132 = sphi 0, %s134
      %s135 = sphi 0, %s132
      %s136 = sphi 0, %s135
      %s152 = sphi 0, %s136
    $region4: #{chocolate_head.1} parent=1 // loop_header_branch
      %17 = sbr.rel (%p15) target = $region8
    $region5: #{chocolate_head.1} parent=1 // loop_body
      %s19 = ssub.s32 %s14, 1
      %s20 = ssub.s32 %s14, 2
      %s27 = sadd.s32 1, %s22
      %p28 = scmp.ge.s32.totalorder %s27, 1
      %s29 = scalar_select %p28, 0, %s27
      %s30 = sadd.s32 1, %s21
      %s31 = scalar_select %p28, %s30, %s21
      %p32 = scmp.ge.s32.totalorder %s31, 2
      %s33 = scalar_select %p32, 0, %s31
      %s35 = sadd.s32 %s34, 1
      %p38 = scmp.eq.s32.totalorder %s14, 1
      %p39 = scmp.ne.s32.totalorder %s34, %s36
      %p40 = scmp.eq.s32.totalorder %s14, 0
      %p41 = por %p39, %p40
      %p42 = scmp.ne.s32.totalorder %s34, %s36
      %p43 = scmp.eq.s32.totalorder %s19, 1
      %p44 = por %p42, %p43
      %p45 = scmp.ne.s32.totalorder %s36, %s37
      %p46 = scmp.eq.s32.totalorder %s19, 0
      %p47 = por %p45, %p46
      %p48 = scmp.ne.s32.totalorder %s36, %s37
      %p49 = scmp.eq.s32.totalorder %s20, 1
      %p50 = por %p48, %p49
      %p52 = scmp.ne.s32.totalorder %s37, %s51
      %p53 = scmp.eq.s32.totalorder %s20, 0
      %p54 = por %p52, %p53
      %s55 = ssub.s32 %s21, %s33
      %p56 = scmp.eq.s32.totalorder %s55, 0
      %s58 = sadd.s32 %s57, 1
      %s59 = scalar_select %p56, %s57, %s58
      %p62 = pneg %p56
      %p63 = scmp.eq.s32.totalorder %s14, 1
      %p64 = por %p62, %p63
      %p65 = scmp.ne.s32.totalorder %s57, %s60
      %p66 = scmp.eq.s32.totalorder %s14, 0
      %p67 = por %p65, %p66
      %p68 = scmp.ne.s32.totalorder %s57, %s60
      %p69 = scmp.eq.s32.totalorder %s19, 1
      %p70 = por %p68, %p69
      %p71 = scmp.ne.s32.totalorder %s60, %s61
      %p72 = scmp.eq.s32.totalorder %s19, 0
      %p73 = por %p71, %p72
      %p74 = scmp.ne.s32.totalorder %s60, %s61
      %p75 = scmp.eq.s32.totalorder %s20, 1
      %p76 = por %p74, %p75
      %p78 = scmp.ne.s32.totalorder %s61, %s77
      %p79 = scmp.eq.s32.totalorder %s20, 0
      %p80 = por %p78, %p79
      %s82 = sadd.s32 %s81, 1
      %p85 = scmp.eq.s32.totalorder %s14, 1
      %p86 = scmp.ne.s32.totalorder %s81, %s83
      %p87 = scmp.eq.s32.totalorder %s14, 0
      %p88 = por %p86, %p87
      %p89 = scmp.ne.s32.totalorder %s81, %s83
      %p90 = scmp.eq.s32.totalorder %s19, 1
      %p91 = por %p89, %p90
      %p92 = scmp.ne.s32.totalorder %s83, %s84
      %p93 = scmp.eq.s32.totalorder %s19, 0
      %p94 = por %p92, %p93
      %p95 = scmp.ne.s32.totalorder %s83, %s84
      %p96 = scmp.eq.s32.totalorder %s20, 1
      %p97 = por %p95, %p96
      %p99 = scmp.ne.s32.totalorder %s84, %s98
      %p100 = scmp.eq.s32.totalorder %s20, 0
      %p101 = por %p99, %p100
      %s102 = ssub.s32 %s22, %s29
      %p103 = scmp.eq.s32.totalorder %s102, 0
      %s105 = sadd.s32 %s104, 1
      %s106 = scalar_select %p103, %s104, %s105
      %p109 = pneg %p103
      %p110 = scmp.eq.s32.totalorder %s14, 1
      %p111 = por %p109, %p110
      %p112 = scmp.ne.s32.totalorder %s104, %s107
      %p113 = scmp.eq.s32.totalorder %s14, 0
      %p114 = por %p112, %p113
      %p115 = scmp.ne.s32.totalorder %s104, %s107
      %p116 = scmp.eq.s32.totalorder %s19, 1
      %p117 = por %p115, %p116
      %p118 = scmp.ne.s32.totalorder %s107, %s108
      %p119 = scmp.eq.s32.totalorder %s19, 0
      %p120 = por %p118, %p119
      %p121 = scmp.ne.s32.totalorder %s107, %s108
      %p122 = scmp.eq.s32.totalorder %s20, 1
      %p123 = por %p121, %p122
      %p125 = scmp.ne.s32.totalorder %s108, %s124
      %p126 = scmp.eq.s32.totalorder %s20, 0
      %p127 = por %p125, %p126
      %s128 = ssub.s32 %s21, %s33
      %s129 = ssub.s32 %s22, %s29
      %s130 = sor.u32 %s128, %s129
      %p131 = scmp.eq.s32.totalorder %s130, 0
      %s133 = sadd.s32 %s132, 1
      %s134 = scalar_select %p131, %s132, %s133
      %p137 = pneg %p131
      %p138 = scmp.eq.s32.totalorder %s14, 1
      %p139 = por %p137, %p138
      %p140 = scmp.ne.s32.totalorder %s132, %s135
      %p141 = scmp.eq.s32.totalorder %s14, 0
      %p142 = por %p140, %p141
      %p143 = scmp.ne.s32.totalorder %s132, %s135
      %p144 = scmp.eq.s32.totalorder %s19, 1
      %p145 = por %p143, %p144
      %p146 = scmp.ne.s32.totalorder %s135, %s136
      %p147 = scmp.eq.s32.totalorder %s19, 0
      %p148 = por %p146, %p147
      %p149 = scmp.ne.s32.totalorder %s135, %s136
      %p150 = scmp.eq.s32.totalorder %s20, 1
      %p151 = por %p149, %p150
      %p153 = scmp.ne.s32.totalorder %s136, %s152
      %p154 = scmp.eq.s32.totalorder %s20, 0
      %p155 = por %p153, %p154
      %p156 = scmp.le.s32.totalorder 1, %s14
      %p157 = scmp.lt.s32.totalorder %s14, 3
      %p158 = pnand %p156, %p157
      %p159 = pneg %p158
      // Predicated region
      $region9: #{chocolate_head.1} parent=5 // pred_check
        _
      $region10: #{chocolate_head.1} parent=5 // pred_check_branch
        %161 = sbr.rel (%p158) target = $region12
      $region11: #{chocolate_head.1} parent=5 // pred_region
        %s162 = ssub.s32 %s14, 1
        // Predicated region
        $region13: #{chocolate_head.1} parent=11 // pred_check
          %p163 = pneg %p47
        $region14: #{chocolate_head.1} parent=11 // pred_check_branch
          %165 = sbr.rel (%p163) target = $region16
        $region15: #{chocolate_head.1} parent=11 // pred_region
          _
        $region16: #{chocolate_head.1} parent=11 // pred_fallthru
          _
        // Predicated region
        $region17: #{chocolate_head.1} parent=11 // pred_check
          %p166 = pneg %p94
        $region18: #{chocolate_head.1} parent=11 // pred_check_branch
          %168 = sbr.rel (%p166) target = $region20
        $region19: #{chocolate_head.1} parent=11 // pred_region
          _
        $region20: #{chocolate_head.1} parent=11 // pred_fallthru
          _
        // Predicated region
        $region21: #{chocolate_head.1} parent=11 // pred_check
          %p169 = pneg %p120
        $region22: #{chocolate_head.1} parent=11 // pred_check_branch
          %171 = sbr.rel (%p169) target = $region24
        $region23: #{chocolate_head.1} parent=11 // pred_region
          %s172 = smul.u32 8, %s24
          %p173 = scmp.lt.s32.totalorder %s172, 7
          %s174 = scalar_select %p173, %s172, 7
          %s175 = smul.addr %s174, 8
          %s176 = scalar_lea.vmem %s3, %s175
          %s177 = smul.u32 8, %s24
        $region24: #{chocolate_head.1} parent=11 // pred_fallthru
          _
      $region12: #{chocolate_head.1} parent=5 // pred_fallthru
        _
      %p178 = scmp.lt.s32.totalorder %s14, 2
      // Predicated region
      $region25: #{chocolate_head.1} parent=5 // pred_check
        %p179 = pneg %p178
      $region26: #{chocolate_head.1} parent=5 // pred_check_branch
        %181 = sbr.rel (%p179) target = $region28
      $region27: #{chocolate_head.1} parent=5 // pred_region
        // Predicated region
        $region29: #{chocolate_head.1} parent=27 // pred_check
          %p182 = pneg %p67
        $region30: #{chocolate_head.1} parent=27 // pred_check_branch
          %184 = sbr.rel (%p182) target = $region32
        $region31: #{chocolate_head.1} parent=27 // pred_region
          %p185 = scmp.lt.s32.totalorder %s21, 1
          %s186 = scalar_select %p185, %s21, 1
          %s187 = smul.addr %s186, 4
          %s188 = smul.addr %s187, 4
          %s189 = scalar_lea.vmem %s1, %s188
        $region32: #{chocolate_head.1} parent=27 // pred_fallthru
          _
      $region28: #{chocolate_head.1} parent=5 // pred_fallthru
        _
      %p190 = scmp.le.s32.totalorder 1, %s14
      %p191 = scmp.lt.s32.totalorder %s14, 3
      %p192 = pnand %p190, %p191
      %p193 = pneg %p192
      // Predicated region
      $region33: #{chocolate_head.1} parent=5 // pred_check
        _
      $region34: #{chocolate_head.1} parent=5 // pred_check_branch
        %195 = sbr.rel (%p192) target = $region36
      $region35: #{chocolate_head.1} parent=5 // pred_region
        %s196 = ssub.s32 %s14, 1
        %p197 = pneg %p47
        %p198 = pneg %p44
        %p199 = scmp.lt.s32.totalorder %s23, 1
        %s200 = scalar_select %p199, %s23, 1
        %s201 = smul.addr %s200, 4
        %s202 = smul.addr %s201, 4
        %s203 = scalar_lea.vmem %s1, %s202
        %p204 = pneg %p73
        %p205 = pneg %p70
        %p206 = pneg %p94
        %p207 = pneg %p91
        %s208 = smul.u32 8, %s24
        %p209 = scmp.lt.s32.totalorder %s208, 7
        %s210 = scalar_select %p209, %s208, 7
        %s211 = smul.addr %s210, 8
        %s212 = scalar_lea.vmem %s3, %s211
        %p213 = pneg %p120
        %p214 = pneg %p117
        %p215 = pneg %p148
        %p216 = pneg %p145
        %s217 = sand.u32 %s135, 1
        %s218 = scalar_lea.sflag [#allocation4], %s217
        %s219 = sand.u32 %s135, 1
        %s220 = smul.addr %s219, 64
        %s221 = scalar_lea.vmem [#allocation3], %s220
        %p222 = scmp.lt.s32.totalorder %s23, 1
        %s223 = scalar_select %p222, %s23, 1
        %s224 = smul.addr %s223, 4
        %s225 = smul.addr %s224, 4
        %s226 = scalar_lea.vmem %s1, %s225
        %s227 = smul.u32 8, %s24
        %p228 = scmp.lt.s32.totalorder %s227, 7
        %s229 = scalar_select %p228, %s227, 7
        %s230 = smul.addr %s229, 8
        %s231 = scalar_lea.vmem %s3, %s230
        %s232 = smul.u32 8, %s24
        %s233 = smul.u32 8, %s24
        %s235 = sld [smem:[#allocation2]]
        %v236 = vld [vmem:[%s226] sm:$0xff]
        %v237 = vld [vmem:[%s226 + $0x8] sm:$0xff]
        %v238 = vld [vmem:[%s2] sm:$0xf]
        %v239 = vld [vmem:[%s2 + $0x4] sm:$0xf]
        %v240 = vld [vmem:[%s2 + $0x8] sm:$0xf]
        %v241 = vld [vmem:[%s2 + $0xc] sm:$0xf]
        %v242 = vld [vmem:[%s2 + $0x10] sm:$0xf]
        %v243 = vld [vmem:[%s2 + $0x14] sm:$0xf]
        %v244 = vld [vmem:[%s2 + $0x18] sm:$0xf]
        %v245 = vld [vmem:[%s2 + $0x1c] sm:$0xf]
        %v246 = vld [vmem:[%s2 + $0x20] sm:$0xf]
        %v247 = vld [vmem:[%s2 + $0x24] sm:$0xf]
        %v248 = vld [vmem:[%s2 + $0x28] sm:$0xf]
        %v249 = vld [vmem:[%s2 + $0x2c] sm:$0xf]
        %v250 = vld [vmem:[%s2 + $0x30] sm:$0xf]
        %v251 = vld [vmem:[%s2 + $0x34] sm:$0xf]
        %v252 = vld [vmem:[%s2 + $0x38] sm:$0xf]
        %v253 = vld [vmem:[%s2 + $0x3c] sm:$0xf]
        %v254 = vld [vmem:[%s2 + $0x40] sm:$0xf]
        %v255 = vld [vmem:[%s2 + $0x44] sm:$0xf]
        %v256 = vld [vmem:[%s2 + $0x48] sm:$0xf]
        %v257 = vld [vmem:[%s2 + $0x4c] sm:$0xf]
        %v258 = vld [vmem:[%s2 + $0x50] sm:$0xf]
        %v259 = vld [vmem:[%s2 + $0x54] sm:$0xf]
        %v260 = vld [vmem:[%s2 + $0x58] sm:$0xf]
        %v261 = vld [vmem:[%s2 + $0x5c] sm:$0xf]
        %v262 = vld [vmem:[%s2 + $0x60] sm:$0xf]
        %v263 = vld [vmem:[%s2 + $0x64] sm:$0xf]
        %v264 = vld [vmem:[%s2 + $0x68] sm:$0xf]
        %v265 = vld [vmem:[%s2 + $0x6c] sm:$0xf]
        %v266 = vld [vmem:[%s2 + $0x70] sm:$0xf]
        %v267 = vld [vmem:[%s2 + $0x74] sm:$0xf]
        %v268 = vld [vmem:[%s2 + $0x78] sm:$0xf]
        %v269 = vld [vmem:[%s2 + $0x7c] sm:$0xf]
        %v270 = vld [vmem:[%s2 + $0x80] sm:$0xf]
        %v271 = vld [vmem:[%s2 + $0x84] sm:$0xf]
        %v272 = vld [vmem:[%s2 + $0x88] sm:$0xf]
        %v273 = vld [vmem:[%s2 + $0x8c] sm:$0xf]
        %v274 = vld [vmem:[%s2 + $0x90] sm:$0xf]
        %v275 = vld [vmem:[%s2 + $0x94] sm:$0xf]
        %v276 = vld [vmem:[%s2 + $0x98] sm:$0xf]
        %v277 = vld [vmem:[%s2 + $0x9c] sm:$0xf]
        %v278 = vld [vmem:[%s2 + $0xa0] sm:$0xf]
        %v279 = vld [vmem:[%s2 + $0xa4] sm:$0xf]
        %v280 = vld [vmem:[%s2 + $0xa8] sm:$0xf]
        %v281 = vld [vmem:[%s2 + $0xac] sm:$0xf]
        %v282 = vld [vmem:[%s2 + $0xb0] sm:$0xf]
        %v283 = vld [vmem:[%s2 + $0xb4] sm:$0xf]
        %v284 = vld [vmem:[%s2 + $0xb8] sm:$0xf]
        %v285 = vld [vmem:[%s2 + $0xbc] sm:$0xf]
        %v286 = vld [vmem:[%s2 + $0xc0] sm:$0xf]
        %v287 = vld [vmem:[%s2 + $0xc4] sm:$0xf]
        %v288 = vld [vmem:[%s2 + $0xc8] sm:$0xf]
        %v289 = vld [vmem:[%s2 + $0xcc] sm:$0xf]
        %v290 = vld [vmem:[%s2 + $0xd0] sm:$0xf]
        %v291 = vld [vmem:[%s2 + $0xd4] sm:$0xf]
        %v292 = vld [vmem:[%s2 + $0xd8] sm:$0xf]
        %v293 = vld [vmem:[%s2 + $0xdc] sm:$0xf]
        %v294 = vld [vmem:[%s2 + $0xe0] sm:$0xf]
        %v295 = vld [vmem:[%s2 + $0xe4] sm:$0xf]
        %v296 = vld [vmem:[%s2 + $0xe8] sm:$0xf]
        %v297 = vld [vmem:[%s2 + $0xec] sm:$0xf]
        %v298 = vld [vmem:[%s2 + $0xf0] sm:$0xf]
        %v299 = vld [vmem:[%s2 + $0xf4] sm:$0xf]
        %v300 = vld [vmem:[%s2 + $0xf8] sm:$0xf]
        %v301 = vld [vmem:[%s2 + $0xfc] sm:$0xf]
        %v304 = vunpack.c.l.b16 %v236
        %v305 = vunpack.c.h.b16 %v236
        %v306 = vunpack.c.l.b16 %v237
        %v307 = vunpack.c.h.b16 %v237
        %v308 = vpack.c.b16 %v304, %v304
        %v309 = vpack.c.b16 %v305, %v305
        %v310 = vpack.c.b16 %v306, %v306
        %v311 = vpack.c.b16 %v307, %v307
        %v380 = vunpack.c.l.b16 %v238
        %v381 = vunpack.c.l.b16 %v239
        %v382 = vunpack.c.l.b16 %v240
        %v383 = vunpack.c.l.b16 %v241
        %v384 = vunpack.c.l.b16 %v242
        %v385 = vunpack.c.l.b16 %v243
        %v386 = vunpack.c.l.b16 %v244
        %v387 = vunpack.c.l.b16 %v245
        %v388 = vunpack.c.l.b16 %v246
        %v389 = vunpack.c.l.b16 %v247
        %v390 = vunpack.c.l.b16 %v248
        %v391 = vunpack.c.l.b16 %v249
        %v392 = vunpack.c.l.b16 %v250
        %v393 = vunpack.c.l.b16 %v251
        %v394 = vunpack.c.l.b16 %v252
        %v395 = vunpack.c.l.b16 %v253
        %v396 = vunpack.c.l.b16 %v254
        %v397 = vunpack.c.l.b16 %v255
        %v398 = vunpack.c.l.b16 %v256
        %v399 = vunpack.c.l.b16 %v257
        %v400 = vunpack.c.l.b16 %v258
        %v401 = vunpack.c.l.b16 %v259
        %v402 = vunpack.c.l.b16 %v260
        %v403 = vunpack.c.l.b16 %v261
        %v404 = vunpack.c.l.b16 %v262
        %v405 = vunpack.c.l.b16 %v263
        %v406 = vunpack.c.l.b16 %v264
        %v407 = vunpack.c.l.b16 %v265
        %v408 = vunpack.c.l.b16 %v266
        %v409 = vunpack.c.l.b16 %v267
        %v410 = vunpack.c.l.b16 %v268
        %v411 = vunpack.c.l.b16 %v269
        %v412 = vunpack.c.l.b16 %v270
        %v413 = vunpack.c.l.b16 %v271
        %v414 = vunpack.c.l.b16 %v272
        %v415 = vunpack.c.l.b16 %v273
        %v416 = vunpack.c.l.b16 %v274
        %v417 = vunpack.c.l.b16 %v275
        %v418 = vunpack.c.l.b16 %v276
        %v419 = vunpack.c.l.b16 %v277
        %v420 = vunpack.c.l.b16 %v278
        %v421 = vunpack.c.l.b16 %v279
        %v422 = vunpack.c.l.b16 %v280
        %v423 = vunpack.c.l.b16 %v281
        %v424 = vunpack.c.l.b16 %v282
        %v425 = vunpack.c.l.b16 %v283
        %v426 = vunpack.c.l.b16 %v284
        %v427 = vunpack.c.l.b16 %v285
        %v428 = vunpack.c.l.b16 %v286
        %v429 = vunpack.c.l.b16 %v287
        %v430 = vunpack.c.l.b16 %v288
        %v431 = vunpack.c.l.b16 %v289
        %v432 = vunpack.c.l.b16 %v290
        %v433 = vunpack.c.l.b16 %v291
        %v434 = vunpack.c.l.b16 %v292
        %v435 = vunpack.c.l.b16 %v293
        %v436 = vunpack.c.l.b16 %v294
        %v437 = vunpack.c.l.b16 %v295
        %v438 = vunpack.c.l.b16 %v296
        %v439 = vunpack.c.l.b16 %v297
        %v440 = vunpack.c.l.b16 %v298
        %v441 = vunpack.c.l.b16 %v299
        %v442 = vunpack.c.l.b16 %v300
        %v443 = vunpack.c.l.b16 %v301
        %v444 = vpack.c.b16 %v381, %v380
        %v445 = vpack.c.b16 %v383, %v382
        %v446 = vpack.c.b16 %v385, %v384
        %v447 = vpack.c.b16 %v387, %v386
        %v448 = vpack.c.b16 %v389, %v388
        %v449 = vpack.c.b16 %v391, %v390
        %v450 = vpack.c.b16 %v393, %v392
        %v451 = vpack.c.b16 %v395, %v394
        %v452 = vpack.c.b16 %v397, %v396
        %v453 = vpack.c.b16 %v399, %v398
        %v454 = vpack.c.b16 %v401, %v400
        %v455 = vpack.c.b16 %v403, %v402
        %v456 = vpack.c.b16 %v405, %v404
        %v457 = vpack.c.b16 %v407, %v406
        %v458 = vpack.c.b16 %v409, %v408
        %v459 = vpack.c.b16 %v411, %v410
        %v460 = vpack.c.b16 %v413, %v412
        %v461 = vpack.c.b16 %v415, %v414
        %v462 = vpack.c.b16 %v417, %v416
        %v463 = vpack.c.b16 %v419, %v418
        %v464 = vpack.c.b16 %v421, %v420
        %v465 = vpack.c.b16 %v423, %v422
        %v466 = vpack.c.b16 %v425, %v424
        %v467 = vpack.c.b16 %v427, %v426
        %v468 = vpack.c.b16 %v429, %v428
        %v469 = vpack.c.b16 %v431, %v430
        %v470 = vpack.c.b16 %v433, %v432
        %v471 = vpack.c.b16 %v435, %v434
        %v472 = vpack.c.b16 %v437, %v436
        %v473 = vpack.c.b16 %v439, %v438
        %v474 = vpack.c.b16 %v441, %v440
        %v475 = vpack.c.b16 %v443, %v442
        %508 = vmatprep.subr.bf16.mxu0 0
        %509 = vmatpush1.bf16.msra.mxu0 %v451
        %510 = vmatprep.subr.bf16.mxu0 0
        %511 = vmatpush1.bf16.msra.mxu0 %v450
        %512 = vmatprep.subr.bf16.mxu0 0
        %513 = vmatpush1.bf16.msra.mxu0 %v449
        %514 = vmatprep.subr.bf16.mxu0 0
        %515 = vmatpush1.bf16.msra.mxu0 %v448
        %516 = vmatprep.subr.bf16.mxu0 0
        %517 = vmatpush1.bf16.msra.mxu0 %v447
        %518 = vmatprep.subr.bf16.mxu0 0
        %519 = vmatpush1.bf16.msra.mxu0 %v446
        %520 = vmatprep.subr.bf16.mxu0 0
        %521 = vmatpush1.bf16.msra.mxu0 %v445
        %522 = vmatprep.subr.bf16.mxu0 0
        %523 = vmatpush1.bf16.msra.mxu0 %v444
        %524 = vmatprep.subr.bf16.mxu0 0
        %525 = vmatpush2.bf16.msra.mxu0 %v459
        %526 = vmatprep.subr.bf16.mxu0 0
        %527 = vmatpush2.bf16.msra.mxu0 %v458
        %528 = vmatprep.subr.bf16.mxu0 0
        %529 = vmatpush2.bf16.msra.mxu0 %v457
        %530 = vmatprep.subr.bf16.mxu0 0
        %531 = vmatpush2.bf16.msra.mxu0 %v456
        %532 = vmatprep.subr.bf16.mxu0 0
        %533 = vmatpush2.bf16.msra.mxu0 %v455
        %534 = vmatprep.subr.bf16.mxu0 0
        %535 = vmatpush2.bf16.msra.mxu0 %v454
        %536 = vmatprep.subr.bf16.mxu0 0
        %537 = vmatpush2.bf16.msra.mxu0 %v453
        %538 = vmatprep.subr.bf16.mxu0 0
        %539 = vmatpush2.bf16.msra.mxu0 %v452
        %540 = vmatprep.mubr.bf16.mxu0 %v309
        %541 = vmatmul.mubr.bf16.gmra.mxu0 %v308
        %v542 = vpop.f32.mrf.mxu0
        %v543 = vadd.f32 0.0, %v542
        %v544 = vpop.f32.mrf.mxu0
        %v545 = vpop.f32.mrf.mxu0
        %v546 = vpop.f32.mrf.mxu0
        %547 = vdwg.mxu0
        %548 = vmatprep.subr.bf16.mxu0 0
        %549 = vmatpush1.bf16.msra.mxu0 %v467
        %550 = vmatprep.subr.bf16.mxu0 0
        %551 = vmatpush1.bf16.msra.mxu0 %v466
        %552 = vmatprep.subr.bf16.mxu0 0
        %553 = vmatpush1.bf16.msra.mxu0 %v465
        %554 = vmatprep.subr.bf16.mxu0 0
        %555 = vmatpush1.bf16.msra.mxu0 %v464
        %556 = vmatprep.subr.bf16.mxu0 0
        %557 = vmatpush1.bf16.msra.mxu0 %v463
        %558 = vmatprep.subr.bf16.mxu0 0
        %559 = vmatpush1.bf16.msra.mxu0 %v462
        %560 = vmatprep.subr.bf16.mxu0 0
        %561 = vmatpush1.bf16.msra.mxu0 %v461
        %562 = vmatprep.subr.bf16.mxu0 0
        %563 = vmatpush1.bf16.msra.mxu0 %v460
        %564 = vmatprep.subr.bf16.mxu0 0
        %565 = vmatpush2.bf16.msra.mxu0 %v475
        %566 = vmatprep.subr.bf16.mxu0 0
        %567 = vmatpush2.bf16.msra.mxu0 %v474
        %568 = vmatprep.subr.bf16.mxu0 0
        %569 = vmatpush2.bf16.msra.mxu0 %v473
        %570 = vmatprep.subr.bf16.mxu0 0
        %571 = vmatpush2.bf16.msra.mxu0 %v472
        %572 = vmatprep.subr.bf16.mxu0 0
        %573 = vmatpush2.bf16.msra.mxu0 %v471
        %574 = vmatprep.subr.bf16.mxu0 0
        %575 = vmatpush2.bf16.msra.mxu0 %v470
        %576 = vmatprep.subr.bf16.mxu0 0
        %577 = vmatpush2.bf16.msra.mxu0 %v469
        %578 = vmatprep.subr.bf16.mxu0 0
        %579 = vmatpush2.bf16.msra.mxu0 %v468
        %580 = vmatprep.mubr.bf16.mxu0 %v311
        %581 = vmatmul.mubr.bf16.gmra.mxu0 %v310
        %v582 = vpop.f32.mrf.mxu0
        %v583 = vadd.f32 %v543, %v582
        %v584 = vpop.f32.mrf.mxu0
        %v585 = vpop.f32.mrf.mxu0
        %v586 = vpop.f32.mrf.mxu0
        %587 = vdwg.mxu0
        %v588 = vld [vmem:[%s231] sm:$0xff]
        %v589 = vld [vmem:[%s231 + $0x8] sm:$0xff]
        %v590 = vld [vmem:[%s231 + $0x10] sm:$0xff]
        %v591 = vld [vmem:[%s231 + $0x18] sm:$0xff]
        %v592 = vld [vmem:[%s231 + $0x20] sm:$0xff]
        %v593 = vld [vmem:[%s231 + $0x28] sm:$0xff]
        %v594 = vld [vmem:[%s231 + $0x30] sm:$0xff]
        %v595 = vld [vmem:[%s231 + $0x38] sm:$0xff]
        %v596 = vstv %s235
        %vm597 = vcmask 64512
        %v599 = vsel %vm597, %v588, 0
        %v602 = vsel %vm597, %v589, 0
        %v605 = vsel %vm597, %v590, 0
        %v608 = vsel %vm597, %v591, 0
        %v611 = vsel %vm597, %v592, 0
        %v614 = vsel %vm597, %v593, 0
        %v617 = vsel %vm597, %v594, 0
        %v620 = vsel %vm597, %v595, 0
        %622 = vmatprep.subr.mxu0 0.0
        %623 = vmatpush1.msra.mxu0 0.0
        %624 = vmatprep.subr.mxu0 0.0
        %625 = vmatpush1.msra.mxu0 0.0
        %626 = vmatprep.subr.mxu0 0.0
        %627 = vmatpush1.msra.mxu0 0.0
        %628 = vmatprep.subr.mxu0 0.0
        %629 = vmatpush1.msra.mxu0 0.0
        %630 = vmatprep.subr.mxu0 0.0
        %631 = vmatpush1.msra.mxu0 0.0
        %632 = vmatprep.subr.mxu0 0.0
        %633 = vmatpush1.msra.mxu0 0.0
        %634 = vmatprep.subr.mxu0 0.0
        %635 = vmatpush1.msra.mxu0 0.0
        %636 = vmatprep.subr.mxu0 0.0
        %637 = vmatpush1.msra.mxu0 0.0
        %638 = vmatprep.subr.mxu0 0.0
        %639 = vmatpush1.msra.mxu0 0.0
        %640 = vmatprep.subr.mxu0 0.0
        %641 = vmatpush1.msra.mxu0 0.0
        %642 = vmatprep.subr.mxu0 0.0
        %643 = vmatpush1.msra.mxu0 0.0
        %644 = vmatprep.subr.mxu0 0.0
        %645 = vmatpush1.msra.mxu0 0.0
        %646 = vmatprep.subr.mxu0 0.0
        %647 = vmatpush1.msra.mxu0 0.0
        %648 = vmatprep.subr.mxu0 0.0
        %649 = vmatpush1.msra.mxu0 0.0
        %650 = vmatprep.subr.mxu0 0.0
        %651 = vmatpush1.msra.mxu0 0.0
        %652 = vmatprep.subr.mxu0 0.0
        %653 = vmatpush1.msra.mxu0 %v583
        %654 = vmatprep.subr.mxu0 0.0
        %655 = vmatpush2.msra.mxu0 0.0
        %656 = vmatprep.subr.mxu0 0.0
        %657 = vmatpush2.msra.mxu0 0.0
        %658 = vmatprep.subr.mxu0 0.0
        %659 = vmatpush2.msra.mxu0 0.0
        %660 = vmatprep.subr.mxu0 0.0
        %661 = vmatpush2.msra.mxu0 0.0
        %662 = vmatprep.subr.mxu0 0.0
        %663 = vmatpush2.msra.mxu0 0.0
        %664 = vmatprep.subr.mxu0 0.0
        %665 = vmatpush2.msra.mxu0 0.0
        %666 = vmatprep.subr.mxu0 0.0
        %667 = vmatpush2.msra.mxu0 0.0
        %668 = vmatprep.subr.mxu0 0.0
        %669 = vmatpush2.msra.mxu0 0.0
        %670 = vmatprep.subr.mxu0 0.0
        %671 = vmatpush2.msra.mxu0 0.0
        %672 = vmatprep.subr.mxu0 0.0
        %673 = vmatpush2.msra.mxu0 0.0
        %674 = vmatprep.subr.mxu0 0.0
        %675 = vmatpush2.msra.mxu0 0.0
        %676 = vmatprep.subr.mxu0 0.0
        %677 = vmatpush2.msra.mxu0 0.0
        %678 = vmatprep.subr.mxu0 0.0
        %679 = vmatpush2.msra.mxu0 0.0
        %680 = vmatprep.subr.mxu0 0.0
        %681 = vmatpush2.msra.mxu0 0.0
        %682 = vmatprep.subr.mxu0 0.0
        %683 = vmatpush2.msra.mxu0 0.0
        %684 = vmatprep.subr.mxu0 0.0
        %685 = vmatpush2.msra.mxu0 0.0
        %686 = vmatprep.mubr.f32.mxu0 0.0
        %687 = vmatmul.mubr.f32.gmra.mxu0 %v599
        %v688 = vpop.f32.mrf.mxu0
        %v689 = vadd.f32 %v596, %v688
        %v690 = vpop.f32.mrf.mxu0
        %691 = vmatprep.mubr.f32.mxu0 0.0
        %692 = vmatmul.mubr.f32.gmra.mxu0 %v602
        %v693 = vpop.f32.mrf.mxu0
        %v694 = vadd.f32 %v596, %v693
        %v695 = vpop.f32.mrf.mxu0
        %696 = vmatprep.mubr.f32.mxu0 0.0
        %697 = vmatmul.mubr.f32.gmra.mxu0 %v605
        %v698 = vpop.f32.mrf.mxu0
        %v699 = vadd.f32 %v596, %v698
        %v700 = vpop.f32.mrf.mxu0
        %701 = vmatprep.mubr.f32.mxu0 0.0
        %702 = vmatmul.mubr.f32.gmra.mxu0 %v608
        %v703 = vpop.f32.mrf.mxu0
        %v704 = vadd.f32 %v596, %v703
        %v705 = vpop.f32.mrf.mxu0
        %706 = vmatprep.mubr.f32.mxu0 0.0
        %707 = vmatmul.mubr.f32.gmra.mxu0 %v611
        %v708 = vpop.f32.mrf.mxu0
        %v709 = vadd.f32 %v596, %v708
        %v710 = vpop.f32.mrf.mxu0
        %711 = vmatprep.mubr.f32.mxu0 0.0
        %712 = vmatmul.mubr.f32.gmra.mxu0 %v614
        %v713 = vpop.f32.mrf.mxu0
        %v714 = vadd.f32 %v596, %v713
        %v715 = vpop.f32.mrf.mxu0
        %716 = vmatprep.mubr.f32.mxu0 0.0
        %717 = vmatmul.mubr.f32.gmra.mxu0 %v617
        %v718 = vpop.f32.mrf.mxu0
        %v719 = vadd.f32 %v596, %v718
        %v720 = vpop.f32.mrf.mxu0
        %721 = vmatprep.mubr.f32.mxu0 0.0
        %722 = vmatmul.mubr.f32.gmra.mxu0 %v620
        %v723 = vpop.f32.mrf.mxu0
        %v724 = vadd.f32 %v596, %v723
        %v725 = vpop.f32.mrf.mxu0
        %726 = vdwg.mxu0
        %727 = vst [vmem:[%s221] sm:$0xff] %v689
        %728 = vst [vmem:[%s221 + $0x8] sm:$0xff] %v694
        %729 = vst [vmem:[%s221 + $0x10] sm:$0xff] %v699
        %730 = vst [vmem:[%s221 + $0x18] sm:$0xff] %v704
        %731 = vst [vmem:[%s221 + $0x20] sm:$0xff] %v709
        %732 = vst [vmem:[%s221 + $0x28] sm:$0xff] %v714
        %733 = vst [vmem:[%s221 + $0x30] sm:$0xff] %v719
        %734 = vst [vmem:[%s221 + $0x38] sm:$0xff] %v724
        %s735 = sand.u32 %s135, 1
        %s736 = scalar_lea.sflag [#allocation4], %s735
        %s737 = sand.u32 %s135, 1
        %s738 = smul.addr %s737, 64
        %s739 = scalar_lea.vmem [#allocation3], %s738
        // Predicated region
        $region37: #{chocolate_head.1} parent=35 // pred_check
          %p740 = pneg %p145
        $region38: #{chocolate_head.1} parent=35 // pred_check_branch
          %742 = sbr.rel (%p740) target = $region40
        $region39: #{chocolate_head.1} parent=35 // pred_region
          %s743 = smul.u32 8, %s24
          %s745 = ssub.s32 1024, 1024
          %746 = vsyncadd %s736, %s745
          %s747 = smul.addr %s23, 8
          %s748 = sadd.s32 %s743, %s747
          %s749 = smul.addr %s748, 128
          %s750 = scalar_lea.hbm %s4, %s749
          %s751 = sshll.u32 %s739, 4
          %s752 = int_to_ptr.vmem [resolvable:$true] %s751
          %757 = dma.vmem_to_hbm [thread:$0]  %s752, 1024, %s750, %s736, 128, 128, 8
        $region40: #{chocolate_head.1} parent=35 // pred_fallthru
          _
      $region36: #{chocolate_head.1} parent=5 // pred_fallthru
        _
      %p758 = scmp.le.s32.totalorder 2, %s14
      // Predicated region
      $region41: #{chocolate_head.1} parent=5 // pred_check
        %p759 = pneg %p758
      $region42: #{chocolate_head.1} parent=5 // pred_check_branch
        %761 = sbr.rel (%p759) target = $region44
      $region43: #{chocolate_head.1} parent=5 // pred_region
        %s762 = ssub.s32 %s14, 2
        // Predicated region
        $region45: #{chocolate_head.1} parent=43 // pred_check
          %p763 = pneg %p151
        $region46: #{chocolate_head.1} parent=43 // pred_check_branch
          %765 = sbr.rel (%p763) target = $region48
        $region47: #{chocolate_head.1} parent=43 // pred_region
          %s766 = sand.u32 %s136, 1
          %s767 = scalar_lea.sflag [#allocation4], %s766
          %s768 = sand.u32 %s136, 1
          %s769 = smul.addr %s768, 64
          %s770 = scalar_lea.vmem [#allocation3], %s769
          %771 = dma.done %s767, 1024
        $region48: #{chocolate_head.1} parent=43 // pred_fallthru
          _
      $region44: #{chocolate_head.1} parent=5 // pred_fallthru
        _
    $region6: #{chocolate_head.1} parent=1 // loop_footer
      %s18 = sadd.s32 1, %s14
    $region7: #{chocolate_head.1} parent=1 // loop_footer_branch
      %13 = sbr.rel target = $region3
    $region8: #{chocolate_head.1} parent=1 // loop_exit
      _
    %772 = vsyncpa [#allocation4], 1
    %s773 = scalar_lea.sflag [#allocation4], 1
    %774 = vsyncpa %s773, 1

</llo_original>
